<compile_context>
chip_gen: v6e
topology: v6e:2x2x1
jax: 0.10.0
libtpu: 0.0.40
codegen_flags: <defaults>
</compile_context>

<pallas_src>
import functools
import math

import jax
import jax.numpy as jnp
from jax.experimental import pallas as pl
from jax.experimental.pallas import tpu as pltpu

_GELU_C = math.sqrt(2.0 / math.pi)


def _new_gelu_f32(h):
    # 0.5*h*(1+tanh(c*(h + 0.044715*h^3))), with h+0.044715*h^3 = h*(1+0.044715*h*h)
    return 0.5 * h * (1.0 + jnp.tanh(_GELU_C * (h * (1.0 + 0.044715 * (h * h)))))


# ---------------------------------------------------------------------------
# Path A: weights VMEM-resident, 1-D grid over M.
# ---------------------------------------------------------------------------
def _ffn_kernel_resident(x_ref, w1_ref, b1_ref, w2_ref, b2_ref, o_ref):
    # x_ref: (tm, D) bf16   w1_ref: (D, H) bf16   b1_ref: (1, H) f32
    # w2_ref: (H, D) bf16   b2_ref: (1, D) f32    o_ref: (tm, D)
    h = jnp.dot(x_ref[...], w1_ref[...], preferred_element_type=jnp.float32)
    h = _new_gelu_f32(h + b1_ref[...])
    o_ref[...] = (
        jnp.dot(h.astype(w2_ref.dtype), w2_ref[...],
                preferred_element_type=jnp.float32)
        + b2_ref[...]
    ).astype(o_ref.dtype)
    # TODO(synk): training-mode dropout would need pltpu.prng_seed /
    # prng_random_bits with a per-call seed; eval mode is identity.


# ---------------------------------------------------------------------------
# Path B: hidden axis tiled (reduction axis last), f32 accumulator, fused tail.
# ---------------------------------------------------------------------------
def _ffn_kernel_tiled(x_ref, w1_ref, b1_ref, w2_ref, b2_ref, o_ref, acc_ref, *,
                      n_h):
    h_idx = pl.program_id(1)

    h = jnp.dot(x_ref[...], w1_ref[...], preferred_element_type=jnp.float32)
    h = _new_gelu_f32(h + b1_ref[...])
    part = jnp.dot(h.astype(w2_ref.dtype), w2_ref[...],
                   preferred_element_type=jnp.float32)

    if n_h == 1:
        o_ref[...] = (part + b2_ref[...]).astype(o_ref.dtype)
    else:
        @pl.when(h_idx == 0)
        def _init():
            acc_ref[...] = part

        @pl.when(jnp.logical_and(h_idx > 0, h_idx < n_h - 1))
        def _accum():
            acc_ref[...] += part

        @pl.when(h_idx == n_h - 1)
        def _finalize():
            # last partial fused with bias-add + cast; one lane-dense store
            o_ref[...] = (acc_ref[...] + part + b2_ref[...]).astype(o_ref.dtype)


# ---------------------------------------------------------------------------
# Wrapper
# ---------------------------------------------------------------------------
def _round_up(a, b):
    return ((a + b - 1) // b) * b


def _vmem_budget_bytes():
    try:
        cap = pltpu.get_tpu_info().vmem_capacity_bytes
    except Exception:
        cap = 64 * 1024 * 1024  # conservative: v7x per-TC physical VMEM
    # Leave headroom for compiler-internal scratch and I/O buffers.
    return min(int(cap * 0.70), 100 * 1024 * 1024)


def _choose_tm(M, tm_cap):
    tm = min(1024, max(8, (tm_cap // 8) * 8))
    # Small M: don't pad M up to a huge tile, and keep >= 2 M tiles when M
    # allows it so the "parallel" axis feeds both v7x TensorCores.
    if M < 2 * tm:
        tm = min(tm, max(8, _round_up((M + 1) // 2, 8)))
    return tm


def _choose_th(H, cap):
    for th in (1024, 512, 256, 128):
        if th <= cap and H % th == 0:
            return th
    return None


def ffn_pallas(x, w1, b1, w2, b2, *, force_hidden_tiling=False, th_cap=None):
    """y = linear_out(new_gelu(linear_in(x))); dropout is identity (eval mode).

    x : (B, T, D).  w1: (D, H), b1: (H,), w2: (H, D), b2: (D,).
    Weights are stored transposed vs. torch.nn.Linear (plain row-major matmul)
    and should be bf16 already (cast once at model init, not per call).
    """
    B, T, D = x.shape
    H = w1.shape[1]
    M = B * T
    out_dtype = x.dtype
    out_it = jnp.dtype(out_dtype).itemsize

    # MXU operands in bf16 (no-op if already bf16); biases / GELU / acc in f32.
    x2 = x.reshape(M, D).astype(jnp.bfloat16)
    w1_bf = w1.astype(jnp.bfloat16)
    w2_bf = w2.astype(jnp.bfloat16)
    b1_2 = b1.reshape(1, H).astype(jnp.float32)
    b2_2 = b2.reshape(1, D).astype(jnp.float32)

    vmem_budget = _vmem_budget_bytes()
    weight_bytes = 2 * D * H * 2  # W1 + W2 in bf16

    resident = (not force_hidden_tiling) and (
        weight_bytes <= int(vmem_budget * 0.45))

    if resident:
        # ----- Path A: weights stay in VMEM; weights are read from HBM once.
        per_row = (2 * (D * 2)          # x tile, double-buffered (bf16)
                   + 2 * (D * out_it)   # out tile, double-buffered
                   + 3 * (H * 4)        # f32 hidden temporaries (headroom)
                   + H * 2)             # bf16 cast of the GELU slab
        tm_cap = max(8, (vmem_budget - 2 * weight_bytes) // max(per_row, 1))
        tm = _choose_tm(M, tm_cap)

        Mp = _round_up(M, tm)
        if Mp != M:
            x2 = jnp.pad(x2, ((0, Mp - M), (0, 0)))
        grid = (Mp // tm,)

        cost = pl.CostEstimate(
            flops=4 * Mp * D * H,
            transcendentals=Mp * H,
            bytes_accessed=(Mp * D * 2            # x (bf16)
                            + weight_bytes        # W1 + W2 read once
                            + H * 4 + D * 4       # biases
                            + Mp * D * out_it),   # output
        )

        out = pl.pallas_call(
            _ffn_kernel_resident,
            out_shape=jax.ShapeDtypeStruct((Mp, D), out_dtype),
            grid_spec=pltpu.PrefetchScalarGridSpec(
                num_scalar_prefetch=0,
                grid=grid,
                in_specs=[
                    pl.BlockSpec((tm, D), lambda i: (i, 0)),   # x tile
                    pl.BlockSpec((D, H), lambda i: (0, 0)),    # W1 (resident)
                    pl.BlockSpec((1, H), lambda i: (0, 0)),    # b1 (resident)
                    pl.BlockSpec((H, D), lambda i: (0, 0)),    # W2 (resident)
                    pl.BlockSpec((1, D), lambda i: (0, 0)),    # b2 (resident)
                ],
                out_specs=pl.BlockSpec((tm, D), lambda i: (i, 0)),
            ),
            compiler_params=pltpu.CompilerParams(
                dimension_semantics=("parallel",),
                vmem_limit_bytes=vmem_budget,
            ),
            cost_estimate=cost,
        )(x2, w1_bf, b1_2, w2_bf, b2_2)
    else:
        # ----- Path B: tile the hidden axis; reduction axis last in the grid.
        th = _choose_th(H, th_cap or 1024)
        Hp = H
        if th is None:
            # H not a multiple of 128: zero-pad the hidden dim (GELU(0)=0, so
            # padded columns/rows contribute nothing to the output).
            Hp = _round_up(H, 128)
            th = 128
            w1_bf = jnp.pad(w1_bf, ((0, 0), (0, Hp - H)))
            w2_bf = jnp.pad(w2_bf, ((0, Hp - H), (0, 0)))
            b1_2 = jnp.pad(b1_2, ((0, 0), (0, Hp - H)))
        # Guard: shrink th if a single double-buffered (D,th)+(th,D) pair would
        # eat more than half the VMEM budget (keeps tm from collapsing to 8).
        while th > 128 and (4 * (D * th * 2)) > vmem_budget // 2:
            th //= 2

        fixed = 4 * (D * th * 2) + 2 * (th * 4 + D * 4)   # W1+W2 (x2 bufs) + biases
        per_row = (2 * (D * 2)          # x tile, double-buffered
                   + 2 * (D * out_it)   # out tile, double-buffered
                   + D * 4              # f32 accumulator scratch
                   + 3 * (th * 4)       # f32 hidden temporaries
                   + th * 2)            # bf16 GELU cast
        tm_cap = max(8, (vmem_budget - fixed) // max(per_row, 1))
        tm = _choose_tm(M, tm_cap)

        Mp = _round_up(M, tm)
        if Mp != M:
            x2 = jnp.pad(x2, ((0, Mp - M), (0, 0)))
        grid = (Mp // tm, Hp // th)

        n_m = grid[0]
        cost = pl.CostEstimate(
            flops=4 * Mp * D * Hp,
            transcendentals=Mp * Hp,
            bytes_accessed=(Mp * D * 2
                            + n_m * 2 * D * Hp * 2       # W1+W2 streamed per M tile
                            + n_m * (Hp * 4 + D * 4)     # biases per M tile
                            + Mp * D * out_it),
        )

        kernel = functools.partial(_ffn_kernel_tiled, n_h=grid[1])
        out = pl.pallas_call(
            kernel,
            out_shape=jax.ShapeDtypeStruct((Mp, D), out_dtype),
            grid_spec=pltpu.PrefetchScalarGridSpec(
                num_scalar_prefetch=0,
                grid=grid,
                in_specs=[
                    pl.BlockSpec((tm, D), lambda i, h: (i, 0)),   # x tile
                    pl.BlockSpec((D, th), lambda i, h: (0, h)),   # W1 column tile
                    pl.BlockSpec((1, th), lambda i, h: (0, h)),   # b1 tile
                    pl.BlockSpec((th, D), lambda i, h: (h, 0)),   # W2 row tile
                    pl.BlockSpec((1, D), lambda i, h: (0, 0)),    # b2
                ],
                out_specs=pl.BlockSpec((tm, D), lambda i, h: (i, 0)),
                scratch_shapes=[pltpu.VMEM((tm, D), jnp.float32)],
            ),
            compiler_params=pltpu.CompilerParams(
                dimension_semantics=("parallel", "arbitrary"),
                vmem_limit_bytes=vmem_budget,
            ),
            cost_estimate=cost,
        )(x2, w1_bf, b1_2, w2_bf, b2_2)

    if Mp != M:
        out = out[:M]
    return out.reshape(B, T, D)


def ffn_reference(x, w1, b1, w2, b2):
    """Pure-JAX f32 reference mirroring the PyTorch forward (eval mode)."""
    h = jnp.einsum("btd,dh->bth", x, w1) + b1
    h = 0.5 * h * (1.0 + jnp.tanh(_GELU_C * (h + 0.044715 * jnp.power(h, 3.0))))
    return jnp.einsum("bth,hd->btd", h, w2) + b2


if __name__ == "__main__":
    key = jax.random.PRNGKey(0)

    def make_params(k, D, H):
        k1, kb1, k2, kb2 = jax.random.split(k, 4)
        lim1 = 1.0 / math.sqrt(D)
        lim2 = 1.0 / math.sqrt(H)
        w1 = jax.random.uniform(k1, (D, H), jnp.float32, -lim1, lim1)
        b1 = jax.random.uniform(kb1, (H,), jnp.float32, -lim1, lim1)
        w2 = jax.random.uniform(k2, (H, D), jnp.float32, -lim2, lim2)
        b2 = jax.random.uniform(kb2, (D,), jnp.float32, -lim2, lim2)
        return w1, b1, w2, b2

    # --- Test 1: default (weight-resident) path, small GPT-ish shapes. ---
    B, T, D = 2, 8, 32
    H = 4 * D
    kx, kp, key = jax.random.split(key, 3)
    x = jax.random.normal(kx, (B, T, D), dtype=jnp.float32)
    w1, b1, w2, b2 = make_params(kp, D, H)
    # Cast master weights to bf16 ONCE (model init), not per call.
    w1_bf, w2_bf = w1.astype(jnp.bfloat16), w2.astype(jnp.bfloat16)

    y = jax.block_until_ready(ffn_pallas(x, w1_bf, b1, w2_bf, b2))
    y_ref = ffn_reference(x, w1, b1, w2, b2)
    assert y.shape == (B, T, D)
    # bf16 MXU operands with f32 accumulation: ~1e-2-level tolerance expected.
    assert jnp.allclose(y, y_ref, atol=3e-2, rtol=3e-2), "resident path mismatch"

    # --- Test 2: forced hidden-tiled path (exercises the f32 accumulator). ---
    B2, T2, D2 = 2, 8, 96
    H2 = 4 * D2
    kx2, kp2, key = jax.random.split(key, 3)
    x2 = jax.random.normal(kx2, (B2, T2, D2), dtype=jnp.float32)
    w1b, b1b, w2b, b2b = make_params(kp2, D2, H2)
    y2 = jax.block_until_ready(
        ffn_pallas(x2, w1b.astype(jnp.bfloat16), b1b,
                   w2b.astype(jnp.bfloat16), b2b,
                   force_hidden_tiling=True, th_cap=128))
    y2_ref = ffn_reference(x2, w1b, b1b, w2b, b2b)
    assert y2.shape == (B2, T2, D2)
    assert jnp.allclose(y2, y2_ref, atol=3e-2, rtol=3e-2), "tiled path mismatch"

    print("KERNEL_OK")
</pallas_src>

<mosaic_0001>
module attributes {stable_mosaic.version = 11 : i64} {
  func.func @_ffn_kernel_resident(%arg0: i32, %arg1: memref<8x32xbf16, #tpu.memory_space<vmem>>, %arg2: memref<32x128xbf16, #tpu.memory_space<vmem>>, %arg3: memref<1x128xf32, #tpu.memory_space<vmem>>, %arg4: memref<128x32xbf16, #tpu.memory_space<vmem>>, %arg5: memref<1x32xf32, #tpu.memory_space<vmem>>, %arg6: memref<8x32xf32, #tpu.memory_space<vmem>>) attributes {dimension_semantics = [#tpu.dimension_semantics<parallel>], iteration_bounds = array<i64: 2>, scalar_prefetch = 0 : i64, scratch_operands = 0 : i64, tpu.core_type = #tpu.core_type<tc>, window_params = [{transform_indices = @transform_0, window_bounds = array<i64: 8, 32>}, {pipeline_mode = #tpu.pipeline_mode<synchronous>, transform_indices = @transform_1, window_bounds = array<i64: 32, 128>}, {pipeline_mode = #tpu.pipeline_mode<synchronous>, transform_indices = @transform_2, window_bounds = array<i64: 1, 128>}, {pipeline_mode = #tpu.pipeline_mode<synchronous>, transform_indices = @transform_3, window_bounds = array<i64: 128, 32>}, {pipeline_mode = #tpu.pipeline_mode<synchronous>, transform_indices = @transform_4, window_bounds = array<i64: 1, 32>}, {transform_indices = @transform_5, window_bounds = array<i64: 8, 32>}]} {
    %c0 = arith.constant 0 : index
    %c0_0 = arith.constant 0 : index
    %0 = vector.load %arg1[%c0, %c0_0] : memref<8x32xbf16, #tpu.memory_space<vmem>>, vector<8x32xbf16>
    %c0_1 = arith.constant 0 : index
    %c0_2 = arith.constant 0 : index
    %1 = vector.load %arg2[%c0_1, %c0_2] : memref<32x128xbf16, #tpu.memory_space<vmem>>, vector<32x128xbf16>
    %cst = arith.constant dense<0.000000e+00> : vector<8x128xf32>
    %2 = tpu.matmul %0, %1, %cst {dimension_numbers = #tpu.dot_dimension_numbers<[1], [0], [0], [1], [0, 0, 1, 1], [], []>} : vector<8x32xbf16>, vector<32x128xbf16>, vector<8x128xf32> -> vector<8x128xf32>
    %c0_3 = arith.constant 0 : index
    %c0_4 = arith.constant 0 : index
    %3 = vector.load %arg3[%c0_3, %c0_4] : memref<1x128xf32, #tpu.memory_space<vmem>>, vector<1x128xf32>
    %4 = vector.broadcast %3 : vector<1x128xf32> to vector<8x128xf32>
    %5 = arith.addf %2, %4 : vector<8x128xf32>
    %cst_5 = arith.constant 5.000000e-01 : f32
    %6 = vector.broadcast %cst_5 : f32 to vector<8x128xf32>
    %7 = arith.mulf %6, %5 : vector<8x128xf32>
    %8 = arith.mulf %5, %5 : vector<8x128xf32>
    %cst_6 = arith.constant 4.471500e-02 : f32
    %9 = vector.broadcast %cst_6 : f32 to vector<8x128xf32>
    %10 = arith.mulf %9, %8 : vector<8x128xf32>
    %cst_7 = arith.constant 1.000000e+00 : f32
    %11 = vector.broadcast %cst_7 : f32 to vector<8x128xf32>
    %12 = arith.addf %11, %10 : vector<8x128xf32>
    %13 = arith.mulf %5, %12 : vector<8x128xf32>
    %cst_8 = arith.constant 0.797884583 : f32
    %14 = vector.broadcast %cst_8 : f32 to vector<8x128xf32>
    %15 = arith.mulf %14, %13 : vector<8x128xf32>
    %16 = math.tanh %15 : vector<8x128xf32>
    %cst_9 = arith.constant 1.000000e+00 : f32
    %17 = vector.broadcast %cst_9 : f32 to vector<8x128xf32>
    %18 = arith.addf %17, %16 : vector<8x128xf32>
    %19 = arith.mulf %7, %18 : vector<8x128xf32>
    %20 = arith.truncf %19 : vector<8x128xf32> to vector<8x128xbf16>
    %c0_10 = arith.constant 0 : index
    %c0_11 = arith.constant 0 : index
    %21 = vector.load %arg4[%c0_10, %c0_11] : memref<128x32xbf16, #tpu.memory_space<vmem>>, vector<128x32xbf16>
    %cst_12 = arith.constant dense<0.000000e+00> : vector<8x32xf32>
    %22 = tpu.matmul %20, %21, %cst_12 {dimension_numbers = #tpu.dot_dimension_numbers<[1], [0], [0], [1], [0, 0, 1, 1], [], []>} : vector<8x128xbf16>, vector<128x32xbf16>, vector<8x32xf32> -> vector<8x32xf32>
    %c0_13 = arith.constant 0 : index
    %c0_14 = arith.constant 0 : index
    %23 = vector.load %arg5[%c0_13, %c0_14] : memref<1x32xf32, #tpu.memory_space<vmem>>, vector<1x32xf32>
    %24 = vector.broadcast %23 : vector<1x32xf32> to vector<8x32xf32>
    %25 = arith.addf %22, %24 : vector<8x32xf32>
    %c0_15 = arith.constant 0 : index
    %c0_16 = arith.constant 0 : index
    %26 = vector.load %arg6[%c0_15, %c0_16] : memref<8x32xf32, #tpu.memory_space<vmem>>, vector<8x32xf32>
    tpu.vector_store %arg6[%c0_15, %c0_16], %25 {strides = array<i32>} : memref<8x32xf32, #tpu.memory_space<vmem>>, vector<8x32xf32>,
    return
  }
  func.func @transform_0(%arg0: i32) -> (i32, i32) {
    %c0_i32 = arith.constant 0 : i32
    %c0_i32_0 = arith.constant 0 : i32
    return %arg0, %c0_i32 : i32, i32
  }
  func.func @transform_1(%arg0: i32) -> (i32, i32) {
    %c0_i32 = arith.constant 0 : i32
    %c0_i32_0 = arith.constant 0 : i32
    %c0_i32_1 = arith.constant 0 : i32
    return %c0_i32, %c0_i32_0 : i32, i32
  }
  func.func @transform_2(%arg0: i32) -> (i32, i32) {
    %c0_i32 = arith.constant 0 : i32
    %c0_i32_0 = arith.constant 0 : i32
    %c0_i32_1 = arith.constant 0 : i32
    return %c0_i32, %c0_i32_0 : i32, i32
  }
  func.func @transform_3(%arg0: i32) -> (i32, i32) {
    %c0_i32 = arith.constant 0 : i32
    %c0_i32_0 = arith.constant 0 : i32
    %c0_i32_1 = arith.constant 0 : i32
    return %c0_i32, %c0_i32_0 : i32, i32
  }
  func.func @transform_4(%arg0: i32) -> (i32, i32) {
    %c0_i32 = arith.constant 0 : i32
    %c0_i32_0 = arith.constant 0 : i32
    %c0_i32_1 = arith.constant 0 : i32
    return %c0_i32, %c0_i32_0 : i32, i32
  }
  func.func @transform_5(%arg0: i32) -> (i32, i32) {
    %c0_i32 = arith.constant 0 : i32
    %c0_i32_0 = arith.constant 0 : i32
    return %arg0, %c0_i32 : i32, i32
  }
}

</mosaic_0001>

<llo_original>
// kernel: tpu_custom_call.1
$region0: #{tpu_custom_call.1}
  #allocation0 [shape = 'u32[]', space=smem, size = 0x4, offset = 0x4, fixed_abs, tag = 'smem constant byte address 0x4 - core index']
  #allocation1 [shape = 'u32[144,128]{1,0:T(1,128)}', space=vmem, size = 0x12000, scoped, tag = 'internal scratch']
  %s0 = inlined_call_operand.vmem [shape: bf16[16,32], index: 0, kind: input, shape index: {}]
  %s1 = inlined_call_operand.vmem [shape: bf16[32,128], index: 1, kind: input, shape index: {}]
  %s2 = inlined_call_operand.vmem [shape: f32[1,128], index: 2, kind: input, shape index: {}]
  %s3 = inlined_call_operand.vmem [shape: bf16[128,32], index: 3, kind: input, shape index: {}]
  %s4 = inlined_call_operand.vmem [shape: f32[1,32], index: 4, kind: input, shape index: {}]
  %s5 = inlined_call_operand.hbm [shape: f32[16,32], index: 5, kind: output, shape index: {}]
  %s6 = sld [smem:[#allocation0]]
  $region53: #{tpu_custom_call.1} parent=0
    _
  %s8 = ssub.s32 1, %s6
  %s9 = scalar_select 0, %s8, %s6
  $region1: #{tpu_custom_call.1} parent=0
    #allocation2 [shape = 'u8[8192]{0}', space=vmem, size = 0x2000, scoped, tag = 'output window, operand 0']
    #allocation3 [shape = 's32[2]{0}', space=sflag, size = 0x8, scoped, tag = 'scoped memory for tpu_custom_call.1']
    %10 = vsyncpa [#allocation3], 0
    %s11 = scalar_lea.sflag [#allocation3], 1
    %12 = vsyncpa %s11, 0
    loop: start=0, step=1, limit=4
    $region2: #{tpu_custom_call.1} parent=1 // loop_pre_header
      _
    $region3: #{tpu_custom_call.1} parent=1 // loop_header
      %s14 = sphi 0, %s18
      %p15 = scmp.ge.s32.totalorder %s14, 4
      %s24 = sphi 0, %s26
      %s27 = sphi 0, %s24
      %s28 = sphi 0, %s27
      %s44 = sphi 0, %s28
      %s48 = sphi 0, %s48
      %s50 = sphi 0, %s48
      %s51 = sphi 0, %s50
      %s65 = sphi 0, %s51
      %s69 = sphi 0, %s69
      %s71 = sphi 0, %s69
      %s72 = sphi 0, %s71
      %s86 = sphi 0, %s72
      %s90 = sphi 0, %s90
      %s92 = sphi 0, %s90
      %s93 = sphi 0, %s92
      %s107 = sphi 0, %s93
      %s111 = sphi 0, %s111
      %s113 = sphi 0, %s111
      %s114 = sphi 0, %s113
      %s128 = sphi 0, %s114
      %s134 = sphi 0, %s136
      %s137 = sphi 0, %s134
      %s138 = sphi 0, %s137
      %s154 = sphi 0, %s138
    $region4: #{tpu_custom_call.1} parent=1 // loop_header_branch
      %17 = sbr.rel (%p15) target = $region8
    $region5: #{tpu_custom_call.1} parent=1 // loop_body
      %s19 = ssub.s32 %s14, 1
      %s20 = ssub.s32 %s14, 2
      %s21 = sadd.s32 %s14, 1
      %s22 = ssub.s32 %s14, %s21
      %p23 = scmp.eq.s32.totalorder %s22, 0
      %s25 = sadd.s32 %s24, 1
      %s26 = scalar_select %p23, %s24, %s25
      %p29 = pneg %p23
      %p30 = scmp.eq.s32.totalorder %s14, 1
      %p31 = por %p29, %p30
      %p32 = scmp.ne.s32.totalorder %s24, %s27
      %p33 = scmp.eq.s32.totalorder %s14, 0
      %p34 = por %p32, %p33
      %p35 = scmp.ne.s32.totalorder %s24, %s27
      %p36 = scmp.eq.s32.totalorder %s19, 1
      %p37 = por %p35, %p36
      %p38 = scmp.ne.s32.totalorder %s27, %s28
      %p39 = scmp.eq.s32.totalorder %s19, 0
      %p40 = por %p38, %p39
      %p41 = scmp.ne.s32.totalorder %s27, %s28
      %p42 = scmp.eq.s32.totalorder %s20, 1
      %p43 = por %p41, %p42
      %p45 = scmp.ne.s32.totalorder %s28, %s44
      %p46 = scmp.eq.s32.totalorder %s20, 0
      %p47 = por %p45, %p46
      %s49 = sadd.s32 %s48, 1
      %p52 = scmp.eq.s32.totalorder %s14, 1
      %p53 = scmp.ne.s32.totalorder %s48, %s50
      %p54 = scmp.eq.s32.totalorder %s14, 0
      %p55 = por %p53, %p54
      %p56 = scmp.ne.s32.totalorder %s48, %s50
      %p57 = scmp.eq.s32.totalorder %s19, 1
      %p58 = por %p56, %p57
      %p59 = scmp.ne.s32.totalorder %s50, %s51
      %p60 = scmp.eq.s32.totalorder %s19, 0
      %p61 = por %p59, %p60
      %p62 = scmp.ne.s32.totalorder %s50, %s51
      %p63 = scmp.eq.s32.totalorder %s20, 1
      %p64 = por %p62, %p63
      %p66 = scmp.ne.s32.totalorder %s51, %s65
      %p67 = scmp.eq.s32.totalorder %s20, 0
      %p68 = por %p66, %p67
      %s70 = sadd.s32 %s69, 1
      %p73 = scmp.eq.s32.totalorder %s14, 1
      %p74 = scmp.ne.s32.totalorder %s69, %s71
      %p75 = scmp.eq.s32.totalorder %s14, 0
      %p76 = por %p74, %p75
      %p77 = scmp.ne.s32.totalorder %s69, %s71
      %p78 = scmp.eq.s32.totalorder %s19, 1
      %p79 = por %p77, %p78
      %p80 = scmp.ne.s32.totalorder %s71, %s72
      %p81 = scmp.eq.s32.totalorder %s19, 0
      %p82 = por %p80, %p81
      %p83 = scmp.ne.s32.totalorder %s71, %s72
      %p84 = scmp.eq.s32.totalorder %s20, 1
      %p85 = por %p83, %p84
      %p87 = scmp.ne.s32.totalorder %s72, %s86
      %p88 = scmp.eq.s32.totalorder %s20, 0
      %p89 = por %p87, %p88
      %s91 = sadd.s32 %s90, 1
      %p94 = scmp.eq.s32.totalorder %s14, 1
      %p95 = scmp.ne.s32.totalorder %s90, %s92
      %p96 = scmp.eq.s32.totalorder %s14, 0
      %p97 = por %p95, %p96
      %p98 = scmp.ne.s32.totalorder %s90, %s92
      %p99 = scmp.eq.s32.totalorder %s19, 1
      %p100 = por %p98, %p99
      %p101 = scmp.ne.s32.totalorder %s92, %s93
      %p102 = scmp.eq.s32.totalorder %s19, 0
      %p103 = por %p101, %p102
      %p104 = scmp.ne.s32.totalorder %s92, %s93
      %p105 = scmp.eq.s32.totalorder %s20, 1
      %p106 = por %p104, %p105
      %p108 = scmp.ne.s32.totalorder %s93, %s107
      %p109 = scmp.eq.s32.totalorder %s20, 0
      %p110 = por %p108, %p109
      %s112 = sadd.s32 %s111, 1
      %p115 = scmp.eq.s32.totalorder %s14, 1
      %p116 = scmp.ne.s32.totalorder %s111, %s113
      %p117 = scmp.eq.s32.totalorder %s14, 0
      %p118 = por %p116, %p117
      %p119 = scmp.ne.s32.totalorder %s111, %s113
      %p120 = scmp.eq.s32.totalorder %s19, 1
      %p121 = por %p119, %p120
      %p122 = scmp.ne.s32.totalorder %s113, %s114
      %p123 = scmp.eq.s32.totalorder %s19, 0
      %p124 = por %p122, %p123
      %p125 = scmp.ne.s32.totalorder %s113, %s114
      %p126 = scmp.eq.s32.totalorder %s20, 1
      %p127 = por %p125, %p126
      %p129 = scmp.ne.s32.totalorder %s114, %s128
      %p130 = scmp.eq.s32.totalorder %s20, 0
      %p131 = por %p129, %p130
      %s132 = ssub.s32 %s14, %s21
      %p133 = scmp.eq.s32.totalorder %s132, 0
      %s135 = sadd.s32 %s134, 1
      %s136 = scalar_select %p133, %s134, %s135
      %p139 = pneg %p133
      %p140 = scmp.eq.s32.totalorder %s14, 1
      %p141 = por %p139, %p140
      %p142 = scmp.ne.s32.totalorder %s134, %s137
      %p143 = scmp.eq.s32.totalorder %s14, 0
      %p144 = por %p142, %p143
      %p145 = scmp.ne.s32.totalorder %s134, %s137
      %p146 = scmp.eq.s32.totalorder %s19, 1
      %p147 = por %p145, %p146
      %p148 = scmp.ne.s32.totalorder %s137, %s138
      %p149 = scmp.eq.s32.totalorder %s19, 0
      %p150 = por %p148, %p149
      %p151 = scmp.ne.s32.totalorder %s137, %s138
      %p152 = scmp.eq.s32.totalorder %s20, 1
      %p153 = por %p151, %p152
      %p155 = scmp.ne.s32.totalorder %s138, %s154
      %p156 = scmp.eq.s32.totalorder %s20, 0
      %p157 = por %p155, %p156
      %p158 = scmp.le.s32.totalorder 1, %s14
      %p159 = scmp.lt.s32.totalorder %s14, 3
      %p160 = pnand %p158, %p159
      %p161 = pneg %p160
      // Predicated region
      $region9: #{tpu_custom_call.1} parent=5 // pred_check
        _
      $region10: #{tpu_custom_call.1} parent=5 // pred_check_branch
        %163 = sbr.rel (%p160) target = $region12
      $region11: #{tpu_custom_call.1} parent=5 // pred_region
        %s164 = ssub.s32 %s14, 1
        // Predicated region
        $region13: #{tpu_custom_call.1} parent=11 // pred_check
          %p165 = pneg %p61
        $region14: #{tpu_custom_call.1} parent=11 // pred_check_branch
          %167 = sbr.rel (%p165) target = $region16
        $region15: #{tpu_custom_call.1} parent=11 // pred_region
          _
        $region16: #{tpu_custom_call.1} parent=11 // pred_fallthru
          _
        // Predicated region
        $region17: #{tpu_custom_call.1} parent=11 // pred_check
          %p168 = pneg %p82
        $region18: #{tpu_custom_call.1} parent=11 // pred_check_branch
          %170 = sbr.rel (%p168) target = $region20
        $region19: #{tpu_custom_call.1} parent=11 // pred_region
          _
        $region20: #{tpu_custom_call.1} parent=11 // pred_fallthru
          _
        // Predicated region
        $region21: #{tpu_custom_call.1} parent=11 // pred_check
          %p171 = pneg %p103
        $region22: #{tpu_custom_call.1} parent=11 // pred_check_branch
          %173 = sbr.rel (%p171) target = $region24
        $region23: #{tpu_custom_call.1} parent=11 // pred_region
          _
        $region24: #{tpu_custom_call.1} parent=11 // pred_fallthru
          _
        // Predicated region
        $region25: #{tpu_custom_call.1} parent=11 // pred_check
          %p174 = pneg %p124
        $region26: #{tpu_custom_call.1} parent=11 // pred_check_branch
          %176 = sbr.rel (%p174) target = $region28
        $region27: #{tpu_custom_call.1} parent=11 // pred_region
          _
        $region28: #{tpu_custom_call.1} parent=11 // pred_fallthru
          _
      $region12: #{tpu_custom_call.1} parent=5 // pred_fallthru
        _
      %p177 = scmp.lt.s32.totalorder %s14, 2
      // Predicated region
      $region29: #{tpu_custom_call.1} parent=5 // pred_check
        %p178 = pneg %p177
      $region30: #{tpu_custom_call.1} parent=5 // pred_check_branch
        %180 = sbr.rel (%p178) target = $region32
      $region31: #{tpu_custom_call.1} parent=5 // pred_region
        // Predicated region
        $region33: #{tpu_custom_call.1} parent=31 // pred_check
          %p181 = pneg %p34
        $region34: #{tpu_custom_call.1} parent=31 // pred_check_branch
          %183 = sbr.rel (%p181) target = $region36
        $region35: #{tpu_custom_call.1} parent=31 // pred_region
          %p184 = scmp.lt.s32.totalorder %s14, 1
          %s185 = scalar_select %p184, %s14, 1
          %s186 = smul.addr %s185, 4
          %s187 = scalar_lea.vmem %s0, %s186
        $region36: #{tpu_custom_call.1} parent=31 // pred_fallthru
          _
      $region32: #{tpu_custom_call.1} parent=5 // pred_fallthru
        _
      %p188 = scmp.le.s32.totalorder 1, %s14
      %p189 = scmp.lt.s32.totalorder %s14, 3
      %p190 = pnand %p188, %p189
      %p191 = pneg %p190
      // Predicated region
      $region37: #{tpu_custom_call.1} parent=5 // pred_check
        _
      $region38: #{tpu_custom_call.1} parent=5 // pred_check_branch
        %193 = sbr.rel (%p190) target = $region40
      $region39: #{tpu_custom_call.1} parent=5 // pred_region
        %s194 = ssub.s32 %s14, 1
        %p195 = scmp.lt.s32.totalorder %s19, 1
        %s196 = scalar_select %p195, %s19, 1
        %s197 = smul.addr %s196, 4
        %s198 = scalar_lea.vmem %s0, %s197
        %p199 = pneg %p40
        %p200 = pneg %p37
        %p201 = pneg %p61
        %p202 = pneg %p58
        %p203 = pneg %p82
        %p204 = pneg %p79
        %p205 = pneg %p103
        %p206 = pneg %p100
        %p207 = pneg %p124
        %p208 = pneg %p121
        %p209 = pneg %p150
        %p210 = pneg %p147
        %s211 = sand.u32 %s137, 1
        %s212 = scalar_lea.sflag [#allocation3], %s211
        %s213 = sand.u32 %s137, 1
        %s214 = smul.addr %s213, 8
        %s215 = scalar_lea.vmem [#allocation2], %s214
        %p216 = scmp.lt.s32.totalorder %s19, 1
        %s217 = scalar_select %p216, %s19, 1
        %s218 = smul.addr %s217, 4
        %s219 = scalar_lea.vmem %s0, %s218
        %v221 = vld [vmem:[%s219] sm:$0xf]
        %v222 = vld [vmem:[%s1] sm:$0xf]
        %v223 = vld [vmem:[%s1 + $0x4] sm:$0xf]
        %v224 = vld [vmem:[%s1 + $0x8] sm:$0xf]
        %v225 = vld [vmem:[%s1 + $0xc] sm:$0xf]
        %v226 = vld [vmem:[%s2] sm:$0x1]
        %v228 = vlaneseq
        %v229 = vshrl.u32 %v228, 7
        %v230 = vsub.s32 0, %v229
        %v231 = vrot.slane %v226, %v230
        %v237 = vunpack.c.l.b16 %v222
        %v238 = vunpack.c.l.b16 %v223
        %v239 = vunpack.c.l.b16 %v224
        %v240 = vunpack.c.l.b16 %v225
        %v241 = vpack.c.b16 %v238, %v237
        %v242 = vpack.c.b16 %v240, %v239
        %vm245 = vcmask 261120
        %v247 = vsel %vm245, %v221, 0
        %249 = vmatprep.subr.bf16.mxu0 0
        %250 = vmatpush1.bf16.msra.mxu0 0
        %251 = vmatprep.subr.bf16.mxu0 0
        %252 = vmatpush1.bf16.msra.mxu0 0
        %253 = vmatprep.subr.bf16.mxu0 0
        %254 = vmatpush1.bf16.msra.mxu0 0
        %255 = vmatprep.subr.bf16.mxu0 0
        %256 = vmatpush1.bf16.msra.mxu0 0
        %257 = vmatprep.subr.bf16.mxu0 0
        %258 = vmatpush1.bf16.msra.mxu0 0
        %259 = vmatprep.subr.bf16.mxu0 0
        %260 = vmatpush1.bf16.msra.mxu0 0
        %261 = vmatprep.subr.bf16.mxu0 0
        %262 = vmatpush1.bf16.msra.mxu0 %v242
        %263 = vmatprep.subr.bf16.mxu0 0
        %264 = vmatpush1.bf16.msra.mxu0 %v241
        %265 = vmatprep.subr.bf16.mxu0 0
        %266 = vmatpush2.bf16.msra.mxu0 0
        %267 = vmatprep.subr.bf16.mxu0 0
        %268 = vmatpush2.bf16.msra.mxu0 0
        %269 = vmatprep.subr.bf16.mxu0 0
        %270 = vmatpush2.bf16.msra.mxu0 0
        %271 = vmatprep.subr.bf16.mxu0 0
        %272 = vmatpush2.bf16.msra.mxu0 0
        %273 = vmatprep.subr.bf16.mxu0 0
        %274 = vmatpush2.bf16.msra.mxu0 0
        %275 = vmatprep.subr.bf16.mxu0 0
        %276 = vmatpush2.bf16.msra.mxu0 0
        %277 = vmatprep.subr.bf16.mxu0 0
        %278 = vmatpush2.bf16.msra.mxu0 0
        %279 = vmatprep.subr.bf16.mxu0 0
        %280 = vmatpush2.bf16.msra.mxu0 0
        %281 = vmatprep.mubr.bf16.mxu0 0
        %282 = vmatmul.mubr.bf16.gmra.mxu0 %v247
        %v283 = vpop.f32.mrf.mxu0
        %v284 = vadd.f32 %v231, %v283
        %v285 = vpop.f32.mrf.mxu0
        %v286 = vpop.f32.mrf.mxu0
        %v287 = vpop.f32.mrf.mxu0
        %288 = vdwg.mxu0
        %v289 = vmul.f32 %v284, 0.5
        %v290 = vmul.f32 %v284, %v284
        %v291 = vmul.f32 %v290, 0.044715
        %v292 = vadd.f32 %v291, 1.0
        %v293 = vmul.f32 %v284, %v292
        %v294 = vmul.f32 %v293, 0.7978846
        %v295 = vtanh.pop %v294
        %v296 = vadd.f32 %v295, 1.0
        %v297 = vmul.f32 %v289, %v296
        %v298 = vpack.c.bf16 %v297, %v297
        %v299 = vld [vmem:[%s3] sm:$0xf]
        %v300 = vld [vmem:[%s3 + $0x4] sm:$0xf]
        %v301 = vld [vmem:[%s3 + $0x8] sm:$0xf]
        %v302 = vld [vmem:[%s3 + $0xc] sm:$0xf]
        %v303 = vld [vmem:[%s3 + $0x10] sm:$0xf]
        %v304 = vld [vmem:[%s3 + $0x14] sm:$0xf]
        %v305 = vld [vmem:[%s3 + $0x18] sm:$0xf]
        %v306 = vld [vmem:[%s3 + $0x1c] sm:$0xf]
        %v307 = vld [vmem:[%s3 + $0x20] sm:$0xf]
        %v308 = vld [vmem:[%s3 + $0x24] sm:$0xf]
        %v309 = vld [vmem:[%s3 + $0x28] sm:$0xf]
        %v310 = vld [vmem:[%s3 + $0x2c] sm:$0xf]
        %v311 = vld [vmem:[%s3 + $0x30] sm:$0xf]
        %v312 = vld [vmem:[%s3 + $0x34] sm:$0xf]
        %v313 = vld [vmem:[%s3 + $0x38] sm:$0xf]
        %v314 = vld [vmem:[%s3 + $0x3c] sm:$0xf]
        %v315 = vld [vmem:[%s4] sm:$0x1]
        %v317 = vlaneseq
        %v318 = vshrl.u32 %v317, 7
        %v319 = vsub.s32 0, %v318
        %v320 = vrot.slane %v315, %v319
        %v338 = vunpack.c.l.b16 %v299
        %v339 = vunpack.c.l.b16 %v300
        %v340 = vunpack.c.l.b16 %v301
        %v341 = vunpack.c.l.b16 %v302
        %v342 = vunpack.c.l.b16 %v303
        %v343 = vunpack.c.l.b16 %v304
        %v344 = vunpack.c.l.b16 %v305
        %v345 = vunpack.c.l.b16 %v306
        %v346 = vunpack.c.l.b16 %v307
        %v347 = vunpack.c.l.b16 %v308
        %v348 = vunpack.c.l.b16 %v309
        %v349 = vunpack.c.l.b16 %v310
        %v350 = vunpack.c.l.b16 %v311
        %v351 = vunpack.c.l.b16 %v312
        %v352 = vunpack.c.l.b16 %v313
        %v353 = vunpack.c.l.b16 %v314
        %v354 = vpack.c.b16 %v339, %v338
        %v355 = vpack.c.b16 %v341, %v340
        %v356 = vpack.c.b16 %v343, %v342
        %v357 = vpack.c.b16 %v345, %v344
        %v358 = vpack.c.b16 %v347, %v346
        %v359 = vpack.c.b16 %v349, %v348
        %v360 = vpack.c.b16 %v351, %v350
        %v361 = vpack.c.b16 %v353, %v352
        %370 = vmatprep.subr.bf16.mxu0 0
        %371 = vmatpush1.bf16.msra.mxu0 %v361
        %372 = vmatprep.subr.bf16.mxu0 0
        %373 = vmatpush1.bf16.msra.mxu0 %v360
        %374 = vmatprep.subr.bf16.mxu0 0
        %375 = vmatpush1.bf16.msra.mxu0 %v359
        %376 = vmatprep.subr.bf16.mxu0 0
        %377 = vmatpush1.bf16.msra.mxu0 %v358
        %378 = vmatprep.subr.bf16.mxu0 0
        %379 = vmatpush1.bf16.msra.mxu0 %v357
        %380 = vmatprep.subr.bf16.mxu0 0
        %381 = vmatpush1.bf16.msra.mxu0 %v356
        %382 = vmatprep.subr.bf16.mxu0 0
        %383 = vmatpush1.bf16.msra.mxu0 %v355
        %384 = vmatprep.subr.bf16.mxu0 0
        %385 = vmatpush1.bf16.msra.mxu0 %v354
        %386 = vmatprep.subr.bf16.mxu0 0
        %387 = vmatpush2.bf16.msra.mxu0 0
        %388 = vmatprep.subr.bf16.mxu0 0
        %389 = vmatpush2.bf16.msra.mxu0 0
        %390 = vmatprep.subr.bf16.mxu0 0
        %391 = vmatpush2.bf16.msra.mxu0 0
        %392 = vmatprep.subr.bf16.mxu0 0
        %393 = vmatpush2.bf16.msra.mxu0 0
        %394 = vmatprep.subr.bf16.mxu0 0
        %395 = vmatpush2.bf16.msra.mxu0 0
        %396 = vmatprep.subr.bf16.mxu0 0
        %397 = vmatpush2.bf16.msra.mxu0 0
        %398 = vmatprep.subr.bf16.mxu0 0
        %399 = vmatpush2.bf16.msra.mxu0 0
        %400 = vmatprep.subr.bf16.mxu0 0
        %401 = vmatpush2.bf16.msra.mxu0 0
        %402 = vmatprep.mubr.bf16.mxu0 0
        %403 = vmatmul.mubr.bf16.gmra.mxu0 %v298
        %v404 = vpop.f32.mrf.mxu0
        %v405 = vadd.f32 %v320, %v404
        %v406 = vpop.f32.mrf.mxu0
        %v407 = vpop.f32.mrf.mxu0
        %v408 = vpop.f32.mrf.mxu0
        %409 = vdwg.mxu0
        %410 = vst.msk [vmem:[%s215] sm:$0xff] %vm245, %v405
        %s411 = sand.u32 %s137, 1
        %s412 = scalar_lea.sflag [#allocation3], %s411
        %s413 = sand.u32 %s137, 1
        %s414 = smul.addr %s413, 8
        %s415 = scalar_lea.vmem [#allocation2], %s414
        // Predicated region
        $region41: #{tpu_custom_call.1} parent=39 // pred_check
          %p416 = pneg %p147
        $region42: #{tpu_custom_call.1} parent=39 // pred_check_branch
          %418 = sbr.rel (%p416) target = $region44
        $region43: #{tpu_custom_call.1} parent=39 // pred_region
          %s420 = ssub.s32 128, 128
          %421 = vsyncadd %s412, %s420
          %s422 = smul.addr %s19, 128
          %s423 = scalar_lea.hbm %s5, %s422
          %s425 = sshll.u32 %s415, 4
          %s426 = int_to_ptr.vmem [resolvable:$true] %s425
          %428 = dma.vmem_to_hbm [thread:$0]  %s426, 128, %s423, %s412
        $region44: #{tpu_custom_call.1} parent=39 // pred_fallthru
          _
      $region40: #{tpu_custom_call.1} parent=5 // pred_fallthru
        _
      %p429 = scmp.le.s32.totalorder 2, %s14
      // Predicated region
      $region45: #{tpu_custom_call.1} parent=5 // pred_check
        %p430 = pneg %p429
      $region46: #{tpu_custom_call.1} parent=5 // pred_check_branch
        %432 = sbr.rel (%p430) target = $region48
      $region47: #{tpu_custom_call.1} parent=5 // pred_region
        %s433 = ssub.s32 %s14, 2
        // Predicated region
        $region49: #{tpu_custom_call.1} parent=47 // pred_check
          %p434 = pneg %p153
        $region50: #{tpu_custom_call.1} parent=47 // pred_check_branch
          %436 = sbr.rel (%p434) target = $region52
        $region51: #{tpu_custom_call.1} parent=47 // pred_region
          %s437 = sand.u32 %s138, 1
          %s438 = scalar_lea.sflag [#allocation3], %s437
          %s439 = sand.u32 %s138, 1
          %s440 = smul.addr %s439, 8
          %s441 = scalar_lea.vmem [#allocation2], %s440
          %442 = dma.done %s438, 128
        $region52: #{tpu_custom_call.1} parent=47 // pred_fallthru
          _
      $region48: #{tpu_custom_call.1} parent=5 // pred_fallthru
        _
    $region6: #{tpu_custom_call.1} parent=1 // loop_footer
      %s18 = sadd.s32 1, %s14
    $region7: #{tpu_custom_call.1} parent=1 // loop_footer_branch
      %13 = sbr.rel target = $region3
    $region8: #{tpu_custom_call.1} parent=1 // loop_exit
      _
    %443 = vsyncpa [#allocation3], 1
    %s444 = scalar_lea.sflag [#allocation3], 1
    %445 = vsyncpa %s444, 1

</llo_original>
